<compile_context>
chip_gen: v5e
topology: v5e:2x2
jax: 0.10.0
libtpu: 0.0.40
codegen_flags: <defaults>
</compile_context>

<pallas_src>
import functools

import jax
import jax.numpy as jnp
from jax import lax
from jax.experimental import pallas as pl
from jax.experimental.pallas import tpu as pltpu


# ----------------------------- generation-aware config ------------------------

@functools.lru_cache(maxsize=1)
def _tpu_generation():
    try:
        kind = jax.devices()[0].device_kind.lower()
    except Exception:
        return 6
    for g in (7, 6, 5):
        if f"v{g}" in kind:
            return g
    return 6


def _vmem_limit_bytes():
    # v7x has only 64 MiB VMEM/TC -> leave compiler headroom; v5e/v6e have 128 MiB.
    return (48 if _tpu_generation() >= 7 else 100) * 1024 * 1024


def _softmax_exp_dtype():
    # bf16 EUP exists on v6e/v7x; keep f32 exp math on v5e (no bf16 EUP).
    return jnp.float32 if _tpu_generation() <= 5 else jnp.bfloat16


def _pick_seq_tile(T):
    big = (256, 128) if _tpu_generation() >= 7 else (512, 256, 128)
    for t in big + (64, 32, 16, 8):
        if T % t == 0:
            return t
    return T  # small / odd T: single full-extent block (valid BlockSpec)


def _pick_m_tile(M):
    for t in (512, 256, 128, 64, 32, 16, 8):
        if M % t == 0:
            return t
    return M


def _round_up(x, m):
    return ((x + m - 1) // m) * m


# ----------------------------- in-kernel helpers -------------------------------

def _layernorm(v, scale, shift, eps=1e-5):
    # v: (rows, D) f32; scale/shift: (1, D) f32. Biased variance (torch unbiased=False).
    mean = jnp.mean(v, axis=-1, keepdims=True)
    c = v - mean
    var = jnp.mean(c * c, axis=-1, keepdims=True)
    return scale * (c * lax.rsqrt(var + eps)) + shift


def _gelu_tanh(x):
    # GELU tanh approximation exactly as in the PyTorch module (f32 VPU math).
    return 0.5 * x * (1.0 + jnp.tanh(jnp.sqrt(2.0 / jnp.pi) * (x + 0.044715 * x ** 3)))


# ----------------------------- Pallas kernels ----------------------------------

def qkv_projection_kernel(x_ref, ln1_s_ref, ln1_b_ref, wqkv_ref,
                          q_ref, k_ref, v_ref, *, num_heads):
    # Runs ONCE per (layer, batch): LN1 + fused QKV projection + head-major layout.
    x = x_ref[0].astype(jnp.float32)                       # (T, D)
    T, D = x.shape
    Dh = D // num_heads
    h = _layernorm(x, ln1_s_ref[...], ln1_b_ref[...])
    qkv = jnp.dot(h.astype(jnp.bfloat16), wqkv_ref[...],
                  preferred_element_type=jnp.float32)      # (T, 3D)
    inv_sqrt_dh = 1.0 / (Dh ** 0.5)
    q = qkv[:, :D] * inv_sqrt_dh                           # fold 1/sqrt(Dh) into Q
    k = qkv[:, D:2 * D]
    v = qkv[:, 2 * D:]

    def to_heads(a):                                       # (T, D) -> (H, T, Dh)
        return jnp.transpose(a.reshape(T, num_heads, Dh), (1, 0, 2))

    q_ref[0] = to_heads(q).astype(jnp.bfloat16)
    k_ref[0] = to_heads(k).astype(jnp.bfloat16)
    v_ref[0] = to_heads(v).astype(jnp.bfloat16)


def attention_ffn_kernel(x_ref, q_ref, k_ref, v_ref,
                         wo_ref, bo_ref,
                         ln2_s_ref, ln2_b_ref,
                         w1_ref, b1_ref, w2_ref, b2_ref,
                         o_ref,
                         m_sc, l_sc, acc_sc,
                         *, tq, tk, exp_dtype):
    qi = pl.program_id(1)
    ki = pl.program_id(2)

    @pl.when(ki == 0)
    def _init():
        m_sc[...] = jnp.full(m_sc.shape, -jnp.inf, dtype=m_sc.dtype)
        l_sc[...] = jnp.zeros(l_sc.shape, dtype=l_sc.dtype)
        acc_sc[...] = jnp.zeros(acc_sc.shape, dtype=acc_sc.dtype)

    # Causality: with tk == tq, kv chunk ki is entirely masked for q tile qi whenever
    # ki > qi, so skip its MXU / EUP work completely.
    @pl.when(ki <= qi)
    def _online_softmax_step():
        q = q_ref[0]                                       # (H, tq, Dh) bf16, pre-scaled
        k = k_ref[0]                                       # (H, tk, Dh) bf16
        v = v_ref[0]                                       # (H, tk, Dh) bf16
        s = jnp.einsum('hqd,hkd->hqk', q, k,
                       preferred_element_type=jnp.float32)  # (H, tq, tk) f32

        row = qi * tq + lax.broadcasted_iota(jnp.int32, (tq, tk), 0)
        col = ki * tk + lax.broadcasted_iota(jnp.int32, (tq, tk), 1)
        s = jnp.where((col <= row)[None, :, :], s, -jnp.inf)

        m_prev = m_sc[...]                                 # (H, tq, 1) f32
        m_new = jnp.maximum(m_prev, jnp.max(s, axis=-1, keepdims=True))
        alpha = jnp.exp(m_prev - m_new)                    # f32
        p = jnp.exp((s - m_new).astype(exp_dtype))         # bf16 EUP on v6e/v7x, f32 on v5e
        l_sc[...] = alpha * l_sc[...] + jnp.sum(p.astype(jnp.float32),
                                                axis=-1, keepdims=True)
        acc_sc[...] = alpha * acc_sc[...] + jnp.einsum(
            'hqk,hkd->hqd', p.astype(jnp.bfloat16), v,
            preferred_element_type=jnp.float32)
        m_sc[...] = m_new

    @pl.when(ki == pl.num_programs(2) - 1)
    def _finalize():
        H, _, Dh = acc_sc.shape
        D = H * Dh
        ctx = acc_sc[...] * pl.reciprocal(l_sc[...], approx=True)     # (H, tq, Dh)
        ctx = jnp.transpose(ctx, (1, 0, 2)).reshape(tq, D)            # (tq, D)
        attn = jnp.dot(ctx.astype(jnp.bfloat16), wo_ref[...],
                       preferred_element_type=jnp.float32) + bo_ref[...]
        # TODO(synk): dropout (drop_rate=0.0) is the identity; no RNG applied.
        x1 = x_ref[0].astype(jnp.float32) + attn                       # residual 1
        h2 = _layernorm(x1, ln2_s_ref[...], ln2_b_ref[...])
        ff1 = jnp.dot(h2.astype(jnp.bfloat16), w1_ref[...],
                      preferred_element_type=jnp.float32) + b1_ref[...]
        g = _gelu_tanh(ff1)
        ff2 = jnp.dot(g.astype(jnp.bfloat16), w2_ref[...],
                      preferred_element_type=jnp.float32) + b2_ref[...]
        o_ref[0] = (x1 + ff2).astype(o_ref.dtype)                      # residual 2


def final_head_kernel(x_ref, ln_s_ref, ln_b_ref, w_ref, o_ref):
    x = x_ref[...].astype(jnp.float32)                    # (tm, D)
    n = _layernorm(x, ln_s_ref[...], ln_b_ref[...])
    o_ref[...] = jnp.dot(n.astype(jnp.bfloat16), w_ref[...],
                         preferred_element_type=jnp.float32)           # (tm, tn)


# ----------------------------- wrappers -----------------------------------------

def run_qkv_projection(x, blk, num_heads):
    B, T, D = x.shape
    Dh = D // num_heads
    kernel = functools.partial(qkv_projection_kernel, num_heads=num_heads)
    hm_shape = jax.ShapeDtypeStruct((B, num_heads, T, Dh), jnp.bfloat16)
    hm_spec = pl.BlockSpec((1, num_heads, T, Dh), lambda b: (b, 0, 0, 0))
    cost = pl.CostEstimate(flops=int(6 * B * T * D * D),
                           transcendentals=int(B * T),
                           bytes_accessed=int(3 * D * D * 2 + 4 * B * T * D * 2))
    return pl.pallas_call(
        kernel,
        out_shape=(hm_shape, hm_shape, hm_shape),
        grid=(B,),
        in_specs=[
            pl.BlockSpec((1, T, D), lambda b: (b, 0, 0)),
            pl.BlockSpec((1, D), lambda b: (0, 0)),
            pl.BlockSpec((1, D), lambda b: (0, 0)),
            pl.BlockSpec((D, 3 * D), lambda b: (0, 0)),
        ],
        out_specs=(hm_spec, hm_spec, hm_spec),
        compiler_params=pltpu.CompilerParams(
            dimension_semantics=("parallel",),
            vmem_limit_bytes=_vmem_limit_bytes()),
        cost_estimate=cost,
    )(x, blk["ln1_s"], blk["ln1_b"], blk["wqkv"])


def run_attention_ffn(x, q, k, v, blk, num_heads):
    B, T, D = x.shape
    Dh = D // num_heads
    H4 = 4 * D
    TQ = _pick_seq_tile(T)
    TK = TQ
    NQ = T // TQ
    NK = T // TK
    kernel = functools.partial(attention_ffn_kernel, tq=TQ, tk=TK,
                               exp_dtype=_softmax_exp_dtype())

    def full(shape):
        return pl.BlockSpec(shape, lambda b, qi, ki, _s=shape: (0,) * len(_s))

    cost = pl.CostEstimate(
        flops=int(2 * B * num_heads * T * T * Dh          # QK^T (causal upper bound)
                  + 2 * B * num_heads * T * T * Dh        # PV
                  + 2 * B * T * D * D                     # out proj
                  + 16 * B * T * D * D),                  # FFN
        transcendentals=int(B * num_heads * T * T + 8 * B * T * D),
        bytes_accessed=int(12 * D * D * 2 + 6 * B * T * D * 2))
    return pl.pallas_call(
        kernel,
        out_shape=jax.ShapeDtypeStruct((B, T, D), jnp.bfloat16),
        grid=(B, NQ, NK),
        in_specs=[
            pl.BlockSpec((1, TQ, D), lambda b, qi, ki: (b, qi, 0)),          # residual tile
            pl.BlockSpec((1, num_heads, TQ, Dh), lambda b, qi, ki: (b, 0, qi, 0)),  # Q tile
            pl.BlockSpec((1, num_heads, TK, Dh), lambda b, qi, ki: (b, 0, ki, 0)),  # K chunk
            pl.BlockSpec((1, num_heads, TK, Dh), lambda b, qi, ki: (b, 0, ki, 0)),  # V chunk
            full((D, D)), full((1, D)),                    # Wo, bo
            full((1, D)), full((1, D)),                    # ln2 scale / shift
            full((D, H4)), full((1, H4)),                  # W1, b1
            full((H4, D)), full((1, D)),                   # W2, b2
        ],
        out_specs=pl.BlockSpec((1, TQ, D), lambda b, qi, ki: (b, qi, 0)),
        scratch_shapes=[
            pltpu.VMEM((num_heads, TQ, 1), jnp.float32),   # running max
            pltpu.VMEM((num_heads, TQ, 1), jnp.float32),   # running denom
            pltpu.VMEM((num_heads, TQ, Dh), jnp.float32),  # running context acc
        ],
        compiler_params=pltpu.CompilerParams(
            dimension_semantics=("parallel", "parallel", "arbitrary"),
            vmem_limit_bytes=_vmem_limit_bytes()),
        cost_estimate=cost,
    )(x, q, k, v, blk["wo"], blk["bo"], blk["ln2_s"], blk["ln2_b"],
      blk["w1"], blk["b1"], blk["w2"], blk["b2"])


def run_final_head(x, ln_s, ln_b, w_out):
    B, T, D = x.shape
    V = w_out.shape[1]
    Vp = _round_up(V, 128)                                 # lane-dense, never full-V blocks
    if Vp != V:
        w_out = jnp.pad(w_out, ((0, 0), (0, Vp - V)))
    M = B * T
    TM = _pick_m_tile(M)
    TN = 128
    for t in (2048, 1024, 512, 256, 128):
        if Vp % t == 0:
            TN = t
            break
    x2 = x.reshape(M, D)
    cost = pl.CostEstimate(flops=int(2 * M * D * Vp),
                           transcendentals=int(M),
                           bytes_accessed=int(D * Vp * 2 + M * D * 2 + M * Vp * 4))
    logits = pl.pallas_call(
        final_head_kernel,
        out_shape=jax.ShapeDtypeStruct((M, Vp), jnp.float32),
        grid=(M // TM, Vp // TN),
        in_specs=[
            pl.BlockSpec((TM, D), lambda mi, vi: (mi, 0)),
            pl.BlockSpec((1, D), lambda mi, vi: (0, 0)),
            pl.BlockSpec((1, D), lambda mi, vi: (0, 0)),
            pl.BlockSpec((D, TN), lambda mi, vi: (0, vi)),
        ],
        out_specs=pl.BlockSpec((TM, TN), lambda mi, vi: (mi, vi)),
        compiler_params=pltpu.CompilerParams(
            dimension_semantics=("parallel", "parallel"),
            vmem_limit_bytes=_vmem_limit_bytes()),
        cost_estimate=cost,
    )(x2, ln_s, ln_b, w_out)
    return logits.reshape(B, T, Vp)[:, :, :V]


# ----------------------------- model ---------------------------------------------

def init_params(key, cfg):
    D = cfg["emb_dim"]
    V = cfg["vocab_size"]
    C = cfg["context_length"]
    H4 = 4 * D
    std = 0.02
    keys = jax.random.split(key, 3 + 4 * cfg["n_layers"])
    ki = iter(keys)

    def w(shape):
        # MXU weights stored bf16 (halves HBM/VMEM traffic); accumulation stays f32.
        return (jax.random.normal(next(ki), shape, jnp.float32) * std).astype(jnp.bfloat16)

    params = {
        "tok_emb": jax.random.normal(next(ki), (V, D), jnp.float32) * std,
        "pos_emb": jax.random.normal(next(ki), (C, D), jnp.float32) * std,
        "out_w": w((D, V)),                                 # (in, out) == torch weight.T
        "final_ln_s": jnp.ones((1, D), jnp.float32),
        "final_ln_b": jnp.zeros((1, D), jnp.float32),
        "blocks": [],
    }
    for _ in range(cfg["n_layers"]):
        blk = {
            "ln1_s": jnp.ones((1, D), jnp.float32),
            "ln1_b": jnp.zeros((1, D), jnp.float32),
            "wqkv": w((D, 3 * D)),                          # fused Q/K/V projection
            "wo": w((D, D)),
            "bo": jnp.zeros((1, D), jnp.float32),
            "ln2_s": jnp.ones((1, D), jnp.float32),
            "ln2_b": jnp.zeros((1, D), jnp.float32),
            "w1": w((D, H4)),
            "b1": jnp.zeros((1, H4), jnp.float32),
            "w2": w((H4, D)),
            "b2": jnp.zeros((1, D), jnp.float32),
        }
        params["blocks"].append(blk)
    return params


def gpt_forward(params, in_idx, cfg):
    B, T = in_idx.shape
    # Embedding gather + positional add (plain JAX glue).
    x = params["tok_emb"][in_idx] + params["pos_emb"][:T][None, :, :]
    # drop_emb: identity (drop_rate = 0.0 / eval semantics).
    x = x.astype(jnp.bfloat16)        # residual stream carried bf16 between kernels
    for blk in params["blocks"]:
        q, k, v = run_qkv_projection(x, blk, cfg["n_heads"])
        x = run_attention_ffn(x, q, k, v, blk, cfg["n_heads"])
    logits = run_final_head(x, params["final_ln_s"], params["final_ln_b"],
                            params["out_w"])
    return logits


# ----------------------------- main -----------------------------------------------

if __name__ == "__main__":
    cfg = {
        "vocab_size": 64,
        "context_length": 8,
        "emb_dim": 32,
        "n_heads": 4,
        "n_layers": 2,
        "drop_rate": 0.0,
        "qkv_bias": False,
    }
    key = jax.random.PRNGKey(0)
    k_param, k_data = jax.random.split(key)
    params = init_params(k_param, cfg)

    B, T = 2, cfg["context_length"]
    in_idx = jax.random.randint(k_data, (B, T), 0, cfg["vocab_size"], dtype=jnp.int32)

    logits = gpt_forward(params, in_idx, cfg)
    logits = jax.block_until_ready(logits)

    assert logits.shape == (B, T, cfg["vocab_size"]), logits.shape
    assert bool(jnp.all(jnp.isfinite(logits)))
    print("KERNEL_OK")
</pallas_src>

<mosaic_0001>
module attributes {stable_mosaic.version = 11 : i64} {
  func.func @qkv_projection_kernel(%arg0: i32, %arg1: memref<1x8x32xbf16, #tpu.memory_space<vmem>>, %arg2: memref<1x32xf32, #tpu.memory_space<vmem>>, %arg3: memref<1x32xf32, #tpu.memory_space<vmem>>, %arg4: memref<32x96xbf16, #tpu.memory_space<vmem>>, %arg5: memref<1x4x8x8xbf16, #tpu.memory_space<vmem>>, %arg6: memref<1x4x8x8xbf16, #tpu.memory_space<vmem>>, %arg7: memref<1x4x8x8xbf16, #tpu.memory_space<vmem>>) attributes {dimension_semantics = [#tpu.dimension_semantics<parallel>], iteration_bounds = array<i64: 2>, scalar_prefetch = 0 : i64, scratch_operands = 0 : i64, tpu.core_type = #tpu.core_type<tc>, window_params = [{transform_indices = @transform_0, window_bounds = array<i64: 1, 8, 32>}, {pipeline_mode = #tpu.pipeline_mode<synchronous>, transform_indices = @transform_1, window_bounds = array<i64: 1, 32>}, {pipeline_mode = #tpu.pipeline_mode<synchronous>, transform_indices = @transform_2, window_bounds = array<i64: 1, 32>}, {pipeline_mode = #tpu.pipeline_mode<synchronous>, transform_indices = @transform_3, window_bounds = array<i64: 32, 96>}, {transform_indices = @transform_4, window_bounds = array<i64: 1, 4, 8, 8>}, {transform_indices = @transform_5, window_bounds = array<i64: 1, 4, 8, 8>}, {transform_indices = @transform_6, window_bounds = array<i64: 1, 4, 8, 8>}]} {
    %c0 = arith.constant 0 : index
    %c0_0 = arith.constant 0 : index
    %c0_1 = arith.constant 0 : index
    %0 = vector.load %arg1[%c0, %c0_0, %c0_1] : memref<1x8x32xbf16, #tpu.memory_space<vmem>>, vector<1x8x32xbf16>
    %1 = vector.shape_cast %0 : vector<1x8x32xbf16> to vector<8x32xbf16>
    %2 = arith.extf %1 : vector<8x32xbf16> to vector<8x32xf32>
    %c0_2 = arith.constant 0 : index
    %c0_3 = arith.constant 0 : index
    %3 = vector.load %arg2[%c0_2, %c0_3] : memref<1x32xf32, #tpu.memory_space<vmem>>, vector<1x32xf32>
    %c0_4 = arith.constant 0 : index
    %c0_5 = arith.constant 0 : index
    %4 = vector.load %arg3[%c0_4, %c0_5] : memref<1x32xf32, #tpu.memory_space<vmem>>, vector<1x32xf32>
    %cst = arith.constant dense<0.000000e+00> : vector<8xf32>
    %5 = vector.multi_reduction <add>, %2, %cst [1] : vector<8x32xf32> to vector<8xf32>
    %6 = vector.shape_cast %5 : vector<8xf32> to vector<8x1xf32>
    %cst_6 = arith.constant 3.200000e+01 : f32
    %7 = vector.broadcast %cst_6 : f32 to vector<8x1xf32>
    %8 = arith.divf %6, %7 : vector<8x1xf32>
    %9 = vector.broadcast %8 : vector<8x1xf32> to vector<8x32xf32>
    %10 = arith.subf %2, %9 : vector<8x32xf32>
    %11 = arith.mulf %10, %10 : vector<8x32xf32>
    %cst_7 = arith.constant dense<0.000000e+00> : vector<8xf32>
    %12 = vector.multi_reduction <add>, %11, %cst_7 [1] : vector<8x32xf32> to vector<8xf32>
    %13 = vector.shape_cast %12 : vector<8xf32> to vector<8x1xf32>
    %cst_8 = arith.constant 3.200000e+01 : f32
    %14 = vector.broadcast %cst_8 : f32 to vector<8x1xf32>
    %15 = arith.divf %13, %14 : vector<8x1xf32>
    %cst_9 = arith.constant 9.99999974E-6 : f32
    %16 = vector.broadcast %cst_9 : f32 to vector<8x1xf32>
    %17 = arith.addf %15, %16 : vector<8x1xf32>
    %18 = math.rsqrt %17 : vector<8x1xf32>
    %19 = vector.broadcast %18 : vector<8x1xf32> to vector<8x32xf32>
    %20 = arith.mulf %10, %19 : vector<8x32xf32>
    %21 = vector.broadcast %3 : vector<1x32xf32> to vector<8x32xf32>
    %22 = arith.mulf %21, %20 : vector<8x32xf32>
    %23 = vector.broadcast %4 : vector<1x32xf32> to vector<8x32xf32>
    %24 = arith.addf %22, %23 : vector<8x32xf32>
    %25 = arith.truncf %24 : vector<8x32xf32> to vector<8x32xbf16>
    %c0_10 = arith.constant 0 : index
    %c0_11 = arith.constant 0 : index
    %26 = vector.load %arg4[%c0_10, %c0_11] : memref<32x96xbf16, #tpu.memory_space<vmem>>, vector<32x96xbf16>
    %cst_12 = arith.constant dense<0.000000e+00> : vector<8x96xf32>
    %27 = tpu.matmul %25, %26, %cst_12 {dimension_numbers = #tpu.dot_dimension_numbers<[1], [0], [0], [1], [0, 0, 1, 1], [], []>} : vector<8x32xbf16>, vector<32x96xbf16>, vector<8x96xf32> -> vector<8x96xf32>
    %28 = vector.extract_strided_slice %27 {offsets = [0, 0], sizes = [8, 32], strides = [1, 1]} : vector<8x96xf32> to vector<8x32xf32>
    %cst_13 = arith.constant 0.353553385 : f32
    %29 = vector.broadcast %cst_13 : f32 to vector<8x32xf32>
    %30 = arith.mulf %28, %29 : vector<8x32xf32>
    %31 = vector.extract_strided_slice %27 {offsets = [0, 32], sizes = [8, 32], strides = [1, 1]} : vector<8x96xf32> to vector<8x32xf32>
    %32 = vector.extract_strided_slice %27 {offsets = [0, 64], sizes = [8, 32], strides = [1, 1]} : vector<8x96xf32> to vector<8x32xf32>
    %33 = vector.shape_cast %30 : vector<8x32xf32> to vector<8x4x8xf32>
    %34 = tpu.transpose %33, [1, 0, 2] : vector<8x4x8xf32> -> vector<4x8x8xf32>
    %35 = arith.truncf %34 : vector<4x8x8xf32> to vector<4x8x8xbf16>
    %c0_14 = arith.constant 0 : index
    %c0_15 = arith.constant 0 : index
    %c0_16 = arith.constant 0 : index
    %c0_17 = arith.constant 0 : index
    %36 = vector.load %arg5[%c0_14, %c0_15, %c0_16, %c0_17] : memref<1x4x8x8xbf16, #tpu.memory_space<vmem>>, vector<1x4x8x8xbf16>
    %37 = vector.shape_cast %36 : vector<1x4x8x8xbf16> to vector<4x8x8xbf16>
    %38 = vector.shape_cast %35 : vector<4x8x8xbf16> to vector<1x4x8x8xbf16>
    tpu.vector_store %arg5[%c0_14, %c0_15, %c0_16, %c0_17], %38 {strides = array<i32>} : memref<1x4x8x8xbf16, #tpu.memory_space<vmem>>, vector<1x4x8x8xbf16>,
    %39 = vector.shape_cast %31 : vector<8x32xf32> to vector<8x4x8xf32>
    %40 = tpu.transpose %39, [1, 0, 2] : vector<8x4x8xf32> -> vector<4x8x8xf32>
    %41 = arith.truncf %40 : vector<4x8x8xf32> to vector<4x8x8xbf16>
    %c0_18 = arith.constant 0 : index
    %c0_19 = arith.constant 0 : index
    %c0_20 = arith.constant 0 : index
    %c0_21 = arith.constant 0 : index
    %42 = vector.load %arg6[%c0_18, %c0_19, %c0_20, %c0_21] : memref<1x4x8x8xbf16, #tpu.memory_space<vmem>>, vector<1x4x8x8xbf16>
    %43 = vector.shape_cast %42 : vector<1x4x8x8xbf16> to vector<4x8x8xbf16>
    %44 = vector.shape_cast %41 : vector<4x8x8xbf16> to vector<1x4x8x8xbf16>
    tpu.vector_store %arg6[%c0_18, %c0_19, %c0_20, %c0_21], %44 {strides = array<i32>} : memref<1x4x8x8xbf16, #tpu.memory_space<vmem>>, vector<1x4x8x8xbf16>,
    %45 = vector.shape_cast %32 : vector<8x32xf32> to vector<8x4x8xf32>
    %46 = tpu.transpose %45, [1, 0, 2] : vector<8x4x8xf32> -> vector<4x8x8xf32>
    %47 = arith.truncf %46 : vector<4x8x8xf32> to vector<4x8x8xbf16>
    %c0_22 = arith.constant 0 : index
    %c0_23 = arith.constant 0 : index
    %c0_24 = arith.constant 0 : index
    %c0_25 = arith.constant 0 : index
    %48 = vector.load %arg7[%c0_22, %c0_23, %c0_24, %c0_25] : memref<1x4x8x8xbf16, #tpu.memory_space<vmem>>, vector<1x4x8x8xbf16>
    %49 = vector.shape_cast %48 : vector<1x4x8x8xbf16> to vector<4x8x8xbf16>
    %50 = vector.shape_cast %47 : vector<4x8x8xbf16> to vector<1x4x8x8xbf16>
    tpu.vector_store %arg7[%c0_22, %c0_23, %c0_24, %c0_25], %50 {strides = array<i32>} : memref<1x4x8x8xbf16, #tpu.memory_space<vmem>>, vector<1x4x8x8xbf16>,
    return
  }
  func.func @transform_0(%arg0: i32) -> (i32, i32, i32) {
    %c0_i32 = arith.constant 0 : i32
    %c0_i32_0 = arith.constant 0 : i32
    %c0_i32_1 = arith.constant 0 : i32
    return %arg0, %c0_i32, %c0_i32_0 : i32, i32, i32
  }
  func.func @transform_1(%arg0: i32) -> (i32, i32) {
    %c0_i32 = arith.constant 0 : i32
    %c0_i32_0 = arith.constant 0 : i32
    %c0_i32_1 = arith.constant 0 : i32
    return %c0_i32, %c0_i32_0 : i32, i32
  }
  func.func @transform_2(%arg0: i32) -> (i32, i32) {
    %c0_i32 = arith.constant 0 : i32
    %c0_i32_0 = arith.constant 0 : i32
    %c0_i32_1 = arith.constant 0 : i32
    return %c0_i32, %c0_i32_0 : i32, i32
  }
  func.func @transform_3(%arg0: i32) -> (i32, i32) {
    %c0_i32 = arith.constant 0 : i32
    %c0_i32_0 = arith.constant 0 : i32
    %c0_i32_1 = arith.constant 0 : i32
    return %c0_i32, %c0_i32_0 : i32, i32
  }
  func.func @transform_4(%arg0: i32) -> (i32, i32, i32, i32) {
    %c0_i32 = arith.constant 0 : i32
    %c0_i32_0 = arith.constant 0 : i32
    %c0_i32_1 = arith.constant 0 : i32
    %c0_i32_2 = arith.constant 0 : i32
    return %arg0, %c0_i32, %c0_i32_0, %c0_i32_1 : i32, i32, i32, i32
  }
  func.func @transform_5(%arg0: i32) -> (i32, i32, i32, i32) {
    %c0_i32 = arith.constant 0 : i32
    %c0_i32_0 = arith.constant 0 : i32
    %c0_i32_1 = arith.constant 0 : i32
    %c0_i32_2 = arith.constant 0 : i32
    return %arg0, %c0_i32, %c0_i32_0, %c0_i32_1 : i32, i32, i32, i32
  }
  func.func @transform_6(%arg0: i32) -> (i32, i32, i32, i32) {
    %c0_i32 = arith.constant 0 : i32
    %c0_i32_0 = arith.constant 0 : i32
    %c0_i32_1 = arith.constant 0 : i32
    %c0_i32_2 = arith.constant 0 : i32
    return %arg0, %c0_i32, %c0_i32_0, %c0_i32_1 : i32, i32, i32, i32
  }
}

</mosaic_0001>

<llo_original>
// kernel: tpu_custom_call.1
$region0: #{tpu_custom_call.1}
  #allocation0 [shape = 'u32[]', space=smem, size = 0x4, offset = 0x4, fixed_abs, tag = 'smem constant byte address 0x4 - core index']
  #allocation1 [shape = 'u32[72,128]{1,0:T(1,128)}', space=vmem, size = 0x9000, scoped, tag = 'internal scratch']
  %s0 = inlined_call_operand.hbm [shape: bf16[2,8,32], index: 0, kind: input, shape index: {}]
  %s1 = inlined_call_operand.hbm [shape: f32[1,32], index: 1, kind: input, shape index: {}]
  %s2 = inlined_call_operand.vmem [shape: f32[1,32], index: 2, kind: input, shape index: {}]
  %s3 = inlined_call_operand.hbm [shape: bf16[32,96], index: 3, kind: input, shape index: {}]
  %s4 = inlined_call_operand.hbm [shape: bf16[2,4,8,8], index: 4, kind: output, shape index: {0}]
  %s5 = inlined_call_operand.hbm [shape: bf16[2,4,8,8], index: 5, kind: output, shape index: {1}]
  %s6 = inlined_call_operand.hbm [shape: bf16[2,4,8,8], index: 6, kind: output, shape index: {2}]
  %7 = xla_tuple %s4, %s5, %s6
  %s8 = sld [smem:[#allocation0]]
  $region77: #{tpu_custom_call.1} parent=0
    _
  %s10 = ssub.s32 1, %s8
  %s11 = scalar_select 0, %s10, %s8
  $region1: #{tpu_custom_call.1} parent=0
    #allocation2 [shape = 'u8[4096]{0}', space=vmem, size = 0x1000, scoped, tag = 'input window, operand 0']
    #allocation3 [shape = 's32[2]{0}', space=sflag, size = 0x8, scoped, tag = 'scoped memory for tpu_custom_call.1']
    #allocation4 [shape = 's32[2]{0}', space=sflag, size = 0x8, scoped, tag = 'scoped memory for tpu_custom_call.1']
    #allocation5 [shape = 'u8[512]{0}', space=vmem, size = 0x400, scoped, tag = 'input window, operand 1, single buffered']
    #allocation6 [shape = 's32[1]{0}', space=sflag, size = 0x4, scoped, tag = 'scoped memory for tpu_custom_call.1']
    #allocation7 [shape = 'u8[8192]{0}', space=vmem, size = 0x2000, scoped, tag = 'input window, operand 3, single buffered']
    #allocation8 [shape = 'u8[16384]{0}', space=vmem, size = 0x4000, scoped, tag = 'output window, operand 0']
    #allocation9 [shape = 'u8[16384]{0}', space=vmem, size = 0x4000, scoped, tag = 'output window, operand 1']
    #allocation10 [shape = 's32[2]{0}', space=sflag, size = 0x8, scoped, tag = 'scoped memory for tpu_custom_call.1']
    #allocation11 [shape = 'u8[16384]{0}', space=vmem, size = 0x4000, scoped, tag = 'output window, operand 2']
    %12 = vsyncpa [#allocation3], 0
    %s13 = scalar_lea.sflag [#allocation3], 1
    %14 = vsyncpa %s13, 0
    %15 = vsyncpa [#allocation6], 0
    %16 = vsyncpa [#allocation4], 0
    %s17 = scalar_lea.sflag [#allocation4], 1
    %18 = vsyncpa %s17, 0
    %19 = vsyncpa [#allocation10], 0
    %s20 = scalar_lea.sflag [#allocation10], 1
    %21 = vsyncpa %s20, 0
    loop: start=0, step=1, limit=4
    $region2: #{tpu_custom_call.1} parent=1 // loop_pre_header
      _
    $region3: #{tpu_custom_call.1} parent=1 // loop_header
      %s23 = sphi 0, %s27
      %p24 = scmp.ge.s32.totalorder %s23, 4
      %s33 = sphi 0, %s35
      %s36 = sphi 0, %s33
      %s37 = sphi 0, %s36
      %s53 = sphi 0, %s37
      %s57 = sphi 0, %s57
      %s59 = sphi 0, %s57
      %s60 = sphi 0, %s59
      %s74 = sphi 0, %s60
      %s78 = sphi 0, %s78
      %s80 = sphi 0, %s78
      %s81 = sphi 0, %s80
      %s95 = sphi 0, %s81
      %s99 = sphi 0, %s99
      %s101 = sphi 0, %s99
      %s102 = sphi 0, %s101
      %s116 = sphi 0, %s102
      %s122 = sphi 0, %s124
      %s125 = sphi 0, %s122
      %s126 = sphi 0, %s125
      %s142 = sphi 0, %s126
      %s148 = sphi 0, %s150
      %s151 = sphi 0, %s148
      %s152 = sphi 0, %s151
      %s168 = sphi 0, %s152
      %s174 = sphi 0, %s176
      %s177 = sphi 0, %s174
      %s178 = sphi 0, %s177
      %s194 = sphi 0, %s178
    $region4: #{tpu_custom_call.1} parent=1 // loop_header_branch
      %26 = sbr.rel (%p24) target = $region8
    $region5: #{tpu_custom_call.1} parent=1 // loop_body
      %s28 = ssub.s32 %s23, 1
      %s29 = ssub.s32 %s23, 2
      %s30 = sadd.s32 %s23, 1
      %s31 = ssub.s32 %s23, %s30
      %p32 = scmp.eq.s32.totalorder %s31, 0
      %s34 = sadd.s32 %s33, 1
      %s35 = scalar_select %p32, %s33, %s34
      %p38 = pneg %p32
      %p39 = scmp.eq.s32.totalorder %s23, 1
      %p40 = por %p38, %p39
      %p41 = scmp.ne.s32.totalorder %s33, %s36
      %p42 = scmp.eq.s32.totalorder %s23, 0
      %p43 = por %p41, %p42
      %p44 = scmp.ne.s32.totalorder %s33, %s36
      %p45 = scmp.eq.s32.totalorder %s28, 1
      %p46 = por %p44, %p45
      %p47 = scmp.ne.s32.totalorder %s36, %s37
      %p48 = scmp.eq.s32.totalorder %s28, 0
      %p49 = por %p47, %p48
      %p50 = scmp.ne.s32.totalorder %s36, %s37
      %p51 = scmp.eq.s32.totalorder %s29, 1
      %p52 = por %p50, %p51
      %p54 = scmp.ne.s32.totalorder %s37, %s53
      %p55 = scmp.eq.s32.totalorder %s29, 0
      %p56 = por %p54, %p55
      %s58 = sadd.s32 %s57, 1
      %p61 = scmp.eq.s32.totalorder %s23, 1
      %p62 = scmp.ne.s32.totalorder %s57, %s59
      %p63 = scmp.eq.s32.totalorder %s23, 0
      %p64 = por %p62, %p63
      %p65 = scmp.ne.s32.totalorder %s57, %s59
      %p66 = scmp.eq.s32.totalorder %s28, 1
      %p67 = por %p65, %p66
      %p68 = scmp.ne.s32.totalorder %s59, %s60
      %p69 = scmp.eq.s32.totalorder %s28, 0
      %p70 = por %p68, %p69
      %p71 = scmp.ne.s32.totalorder %s59, %s60
      %p72 = scmp.eq.s32.totalorder %s29, 1
      %p73 = por %p71, %p72
      %p75 = scmp.ne.s32.totalorder %s60, %s74
      %p76 = scmp.eq.s32.totalorder %s29, 0
      %p77 = por %p75, %p76
      %s79 = sadd.s32 %s78, 1
      %p82 = scmp.eq.s32.totalorder %s23, 1
      %p83 = scmp.ne.s32.totalorder %s78, %s80
      %p84 = scmp.eq.s32.totalorder %s23, 0
      %p85 = por %p83, %p84
      %p86 = scmp.ne.s32.totalorder %s78, %s80
      %p87 = scmp.eq.s32.totalorder %s28, 1
      %p88 = por %p86, %p87
      %p89 = scmp.ne.s32.totalorder %s80, %s81
      %p90 = scmp.eq.s32.totalorder %s28, 0
      %p91 = por %p89, %p90
      %p92 = scmp.ne.s32.totalorder %s80, %s81
      %p93 = scmp.eq.s32.totalorder %s29, 1
      %p94 = por %p92, %p93
      %p96 = scmp.ne.s32.totalorder %s81, %s95
      %p97 = scmp.eq.s32.totalorder %s29, 0
      %p98 = por %p96, %p97
      %s100 = sadd.s32 %s99, 1
      %p103 = scmp.eq.s32.totalorder %s23, 1
      %p104 = scmp.ne.s32.totalorder %s99, %s101
      %p105 = scmp.eq.s32.totalorder %s23, 0
      %p106 = por %p104, %p105
      %p107 = scmp.ne.s32.totalorder %s99, %s101
      %p108 = scmp.eq.s32.totalorder %s28, 1
      %p109 = por %p107, %p108
      %p110 = scmp.ne.s32.totalorder %s101, %s102
      %p111 = scmp.eq.s32.totalorder %s28, 0
      %p112 = por %p110, %p111
      %p113 = scmp.ne.s32.totalorder %s101, %s102
      %p114 = scmp.eq.s32.totalorder %s29, 1
      %p115 = por %p113, %p114
      %p117 = scmp.ne.s32.totalorder %s102, %s116
      %p118 = scmp.eq.s32.totalorder %s29, 0
      %p119 = por %p117, %p118
      %s120 = ssub.s32 %s23, %s30
      %p121 = scmp.eq.s32.totalorder %s120, 0
      %s123 = sadd.s32 %s122, 1
      %s124 = scalar_select %p121, %s122, %s123
      %p127 = pneg %p121
      %p128 = scmp.eq.s32.totalorder %s23, 1
      %p129 = por %p127, %p128
      %p130 = scmp.ne.s32.totalorder %s122, %s125
      %p131 = scmp.eq.s32.totalorder %s23, 0
      %p132 = por %p130, %p131
      %p133 = scmp.ne.s32.totalorder %s122, %s125
      %p134 = scmp.eq.s32.totalorder %s28, 1
      %p135 = por %p133, %p134
      %p136 = scmp.ne.s32.totalorder %s125, %s126
      %p137 = scmp.eq.s32.totalorder %s28, 0
      %p138 = por %p136, %p137
      %p139 = scmp.ne.s32.totalorder %s125, %s126
      %p140 = scmp.eq.s32.totalorder %s29, 1
      %p141 = por %p139, %p140
      %p143 = scmp.ne.s32.totalorder %s126, %s142
      %p144 = scmp.eq.s32.totalorder %s29, 0
      %p145 = por %p143, %p144
      %s146 = ssub.s32 %s23, %s30
      %p147 = scmp.eq.s32.totalorder %s146, 0
      %s149 = sadd.s32 %s148, 1
      %s150 = scalar_select %p147, %s148, %s149
      %p153 = pneg %p147
      %p154 = scmp.eq.s32.totalorder %s23, 1
      %p155 = por %p153, %p154
      %p156 = scmp.ne.s32.totalorder %s148, %s151
      %p157 = scmp.eq.s32.totalorder %s23, 0
      %p158 = por %p156, %p157
      %p159 = scmp.ne.s32.totalorder %s148, %s151
      %p160 = scmp.eq.s32.totalorder %s28, 1
      %p161 = por %p159, %p160
      %p162 = scmp.ne.s32.totalorder %s151, %s152
      %p163 = scmp.eq.s32.totalorder %s28, 0
      %p164 = por %p162, %p163
      %p165 = scmp.ne.s32.totalorder %s151, %s152
      %p166 = scmp.eq.s32.totalorder %s29, 1
      %p167 = por %p165, %p166
      %p169 = scmp.ne.s32.totalorder %s152, %s168
      %p170 = scmp.eq.s32.totalorder %s29, 0
      %p171 = por %p169, %p170
      %s172 = ssub.s32 %s23, %s30
      %p173 = scmp.eq.s32.totalorder %s172, 0
      %s175 = sadd.s32 %s174, 1
      %s176 = scalar_select %p173, %s174, %s175
      %p179 = pneg %p173
      %p180 = scmp.eq.s32.totalorder %s23, 1
      %p181 = por %p179, %p180
      %p182 = scmp.ne.s32.totalorder %s174, %s177
      %p183 = scmp.eq.s32.totalorder %s23, 0
      %p184 = por %p182, %p183
      %p185 = scmp.ne.s32.totalorder %s174, %s177
      %p186 = scmp.eq.s32.totalorder %s28, 1
      %p187 = por %p185, %p186
      %p188 = scmp.ne.s32.totalorder %s177, %s178
      %p189 = scmp.eq.s32.totalorder %s28, 0
      %p190 = por %p188, %p189
      %p191 = scmp.ne.s32.totalorder %s177, %s178
      %p192 = scmp.eq.s32.totalorder %s29, 1
      %p193 = por %p191, %p192
      %p195 = scmp.ne.s32.totalorder %s178, %s194
      %p196 = scmp.eq.s32.totalorder %s29, 0
      %p197 = por %p195, %p196
      %p198 = scmp.le.s32.totalorder 1, %s23
      %p199 = scmp.lt.s32.totalorder %s23, 3
      %p200 = pnand %p198, %p199
      %p201 = pneg %p200
      // Predicated region
      $region9: #{tpu_custom_call.1} parent=5 // pred_check
        _
      $region10: #{tpu_custom_call.1} parent=5 // pred_check_branch
        %203 = sbr.rel (%p200) target = $region12
      $region11: #{tpu_custom_call.1} parent=5 // pred_region
        %s204 = ssub.s32 %s23, 1
        // Predicated region
        $region13: #{tpu_custom_call.1} parent=11 // pred_check
          %p205 = pneg %p70
        $region14: #{tpu_custom_call.1} parent=11 // pred_check_branch
          %207 = sbr.rel (%p205) target = $region16
        $region15: #{tpu_custom_call.1} parent=11 // pred_region
          %209 = vsyncadd [#allocation6], 0
          %s211 = sshll.u32 %s1, 4
          %s212 = int_to_ptr.hbm [resolvable:$true] %s211
          %s213 = sshll.u32 [#allocation5], 4
          %s214 = int_to_ptr.vmem [resolvable:$true] %s213
          %216 = dma.hbm_to_vmem [thread:$0]  %s212, 16, %s214, [#allocation6]
        $region16: #{tpu_custom_call.1} parent=11 // pred_fallthru
          _
        // Predicated region
        $region17: #{tpu_custom_call.1} parent=11 // pred_check
          %p217 = pneg %p91
        $region18: #{tpu_custom_call.1} parent=11 // pred_check_branch
          %219 = sbr.rel (%p217) target = $region20
        $region19: #{tpu_custom_call.1} parent=11 // pred_region
          _
        $region20: #{tpu_custom_call.1} parent=11 // pred_fallthru
          _
        // Predicated region
        $region21: #{tpu_custom_call.1} parent=11 // pred_check
          %p220 = pneg %p112
        $region22: #{tpu_custom_call.1} parent=11 // pred_check_branch
          %222 = sbr.rel (%p220) target = $region24
        $region23: #{tpu_custom_call.1} parent=11 // pred_region
          %224 = vsyncadd [#allocation6], 0
          %s225 = sshll.u32 %s3, 4
          %s226 = int_to_ptr.hbm [resolvable:$true] %s225
          %s227 = sshll.u32 [#allocation7], 4
          %s228 = int_to_ptr.vmem [resolvable:$true] %s227
          %233 = dma.hbm_to_vmem [thread:$0]  %s226, 256, %s228, [#allocation6], 64, 64, 4
        $region24: #{tpu_custom_call.1} parent=11 // pred_fallthru
          _
      $region12: #{tpu_custom_call.1} parent=5 // pred_fallthru
        _
      %p234 = scmp.lt.s32.totalorder %s23, 2
      // Predicated region
      $region25: #{tpu_custom_call.1} parent=5 // pred_check
        %p235 = pneg %p234
      $region26: #{tpu_custom_call.1} parent=5 // pred_check_branch
        %237 = sbr.rel (%p235) target = $region28
      $region27: #{tpu_custom_call.1} parent=5 // pred_region
        // Predicated region
        $region29: #{tpu_custom_call.1} parent=27 // pred_check
          %p238 = pneg %p43
        $region30: #{tpu_custom_call.1} parent=27 // pred_check_branch
          %240 = sbr.rel (%p238) target = $region32
        $region31: #{tpu_custom_call.1} parent=27 // pred_region
          %s241 = sand.u32 %s33, 1
          %s242 = scalar_lea.sflag [#allocation3], %s241
          %s243 = sand.u32 %s33, 1
          %s244 = smul.addr %s243, 4
          %s245 = scalar_lea.vmem [#allocation2], %s244
          %247 = vsyncadd %s242, 0
          %s248 = smul.addr %s23, 4
          %s249 = scalar_lea.hbm %s0, %s248
          %s251 = sshll.u32 %s249, 4
          %s252 = int_to_ptr.hbm [resolvable:$true] %s251
          %s253 = sshll.u32 %s245, 4
          %s254 = int_to_ptr.vmem [resolvable:$true] %s253
          %256 = dma.hbm_to_vmem [thread:$0]  %s252, 64, %s254, %s242
        $region32: #{tpu_custom_call.1} parent=27 // pred_fallthru
          _
      $region28: #{tpu_custom_call.1} parent=5 // pred_fallthru
        _
      %p257 = scmp.le.s32.totalorder 1, %s23
      %p258 = scmp.lt.s32.totalorder %s23, 3
      %p259 = pnand %p257, %p258
      %p260 = pneg %p259
      // Predicated region
      $region33: #{tpu_custom_call.1} parent=5 // pred_check
        _
      $region34: #{tpu_custom_call.1} parent=5 // pred_check_branch
        %262 = sbr.rel (%p259) target = $region36
      $region35: #{tpu_custom_call.1} parent=5 // pred_region
        %s263 = ssub.s32 %s23, 1
        %s264 = sand.u32 %s36, 1
        %s265 = scalar_lea.sflag [#allocation3], %s264
        %s266 = sand.u32 %s36, 1
        %s267 = smul.addr %s266, 4
        %s268 = scalar_lea.vmem [#allocation2], %s267
        // Predicated region
        $region37: #{tpu_custom_call.1} parent=35 // pred_check
          %p269 = pneg %p49
        $region38: #{tpu_custom_call.1} parent=35 // pred_check_branch
          %271 = sbr.rel (%p269) target = $region40
        $region39: #{tpu_custom_call.1} parent=35 // pred_region
          %273 = dma.done %s265, 64
        $region40: #{tpu_custom_call.1} parent=35 // pred_fallthru
          _
        // Predicated region
        $region41: #{tpu_custom_call.1} parent=35 // pred_check
          %p274 = pneg %p70
        $region42: #{tpu_custom_call.1} parent=35 // pred_check_branch
          %276 = sbr.rel (%p274) target = $region44
        $region43: #{tpu_custom_call.1} parent=35 // pred_region
          %278 = dma.done [#allocation6], 16
        $region44: #{tpu_custom_call.1} parent=35 // pred_fallthru
          _
        // Predicated region
        $region45: #{tpu_custom_call.1} parent=35 // pred_check
          %p279 = pneg %p112
        $region46: #{tpu_custom_call.1} parent=35 // pred_check_branch
          %281 = sbr.rel (%p279) target = $region48
        $region47: #{tpu_custom_call.1} parent=35 // pred_region
          %283 = dma.done [#allocation6], 256
        $region48: #{tpu_custom_call.1} parent=35 // pred_fallthru
          _
        %s284 = sand.u32 %s36, 1
        %s285 = scalar_lea.sflag [#allocation3], %s284
        %s286 = sand.u32 %s36, 1
        %s287 = smul.addr %s286, 4
        %s288 = scalar_lea.vmem [#allocation2], %s287
        %p289 = pneg %p49
        %p290 = pneg %p46
        %p291 = pneg %p70
        %p292 = pneg %p67
        %p293 = pneg %p91
        %p294 = pneg %p88
        %p295 = pneg %p112
        %p296 = pneg %p109
        %p297 = pneg %p138
        %p298 = pneg %p135
        %s299 = sand.u32 %s125, 1
        %s300 = scalar_lea.sflag [#allocation4], %s299
        %s301 = sand.u32 %s125, 1
        %s302 = smul.addr %s301, 16
        %s303 = scalar_lea.vmem [#allocation8], %s302
        %p304 = pneg %p164
        %p305 = pneg %p161
        %s306 = sand.u32 %s28, 1
        %s307 = scalar_lea.sflag [#allocation10], %s306
        %s308 = sand.u32 %s151, 1
        %s309 = smul.addr %s308, 16
        %s310 = scalar_lea.vmem [#allocation9], %s309
        %p311 = pneg %p190
        %p312 = pneg %p187
        %s313 = sand.u32 %s28, 1
        %s314 = scalar_lea.sflag [#allocation10], %s313
        %s315 = sand.u32 %s177, 1
        %s316 = smul.addr %s315, 16
        %s317 = scalar_lea.vmem [#allocation11], %s316
        %v319 = vld [vmem:[%s268] sm:$0xf]
        %v320 = vunpack.c.l.bf16 %v319
        %v321 = vld [vmem:[#allocation5] sm:$0x1]
        %v322 = vld [vmem:[%s2] sm:$0x1]
        %vm323 = vcmask 261120
        %v324 = vsel %vm323, %v320, 0.0
        %325 = vadd.xlane.f32.xlu0 %v324
        %v326 = vpop.xlane.xlu0 %325
        %v327 = vrcp.pop 32.0
        %v328 = vmul.f32 32.0, %v327
        %v329 = vsub.f32 1.0, %v328
        %v330 = vmul.f32 %v327, %v329
        %v331 = vadd.f32 %v327, %v330
        %vm332 = vweird.f32 %v327
        %v333 = vsel %vm332, %v327, %v331
        %v334 = vmul.f32 %v326, %v333
        %v335 = vsub.f32 %v320, %v334
        %v336 = vmul.f32 %v335, %v335
        %v337 = vsel %vm323, %v336, 0.0
        %338 = vadd.xlane.f32.xlu0 %v337
        %v339 = vpop.xlane.xlu0 %338
        %v340 = vmul.f32 %v339, %v333
        %v341 = vadd.f32 %v340, 1e-05
        %v342 = vrsqrt.pop %v341
        %v343 = vmul.f32 %v342, %v341
        %v344 = vmul.f32 %v343, %v342
        %v345 = vmul.f32 0.5, %v344
        %v346 = vsub.f32 1.5, %v345
        %v347 = vmul.f32 %v342, %v346
        %vm348 = vweird.f32 %v341
        %vm349 = vweird.f32 %v342
        %vm350 = vmor %vm348, %vm349
        %v351 = vsel %vm350, %v342, %v347
        %v352 = vmul.f32 %v335, %v351
        %v354 = vperm.slane %v321, 0
        %v356 = vmul.f32 %v354, %v352
        %v358 = vperm.slane %v322, 0
        %v360 = vadd.f32 %v356, %v358
        %v361 = vpack.c.bf16 %v360, %v360
        %v362 = vld [vmem:[#allocation7] sm:$0xf]
        %v363 = vld [vmem:[#allocation7 + $0x4] sm:$0xf]
        %v364 = vld [vmem:[#allocation7 + $0x8] sm:$0xf]
        %v365 = vld [vmem:[#allocation7 + $0xc] sm:$0xf]
        %v370 = vunpack.c.l.b16 %v362
        %v371 = vunpack.c.l.b16 %v363
        %v372 = vunpack.c.l.b16 %v364
        %v373 = vunpack.c.l.b16 %v365
        %v374 = vpack.c.b16 %v371, %v370
        %v375 = vpack.c.b16 %v373, %v372
        %v379 = vsel %vm323, %v361, 0
        %381 = vmatpush.bf16.msra.mxu0 0
        %382 = vmatpush.bf16.msra.mxu0 0
        %383 = vmatpush.bf16.msra.mxu0 0
        %384 = vmatpush.bf16.msra.mxu0 0
        %385 = vmatpush.bf16.msra.mxu0 0
        %386 = vmatpush.bf16.msra.mxu0 0
        %387 = vmatpush.bf16.msra.mxu0 %v375
        %388 = vmatpush.bf16.msra.mxu0 %v374
        %389 = vmatmul.bf16.gmra.mxu0 %v379
        %v390 = vpop.f32.mrf.mxu0
        %v391 = vadd.f32 0.0, %v390
        %v392 = vpop.f32.mrf.mxu0
        %393 = vdwg.mxu0
        %v394 = vmul.f32 %v391, 0.35355338
        %396 = vrot.lane.b32.xlu0 %v394, 120
        %v397 = vpop.permute.xlu0 %396
        %399 = vrot.lane.b32.xlu0 %v394, 112
        %v400 = vpop.permute.xlu0 %399
        %402 = vrot.lane.b32.xlu0 %v394, 104
        %v403 = vpop.permute.xlu0 %402
        %v405 = vrot.slane %v400, 4
        %vm406 = vcmask 1047556
        %v407 = vsel %vm406, %v405, %v394
        %v408 = vrot.slane %v394, 4
        %v409 = vsel %vm406, %v400, %v408
        %v411 = vunpack.c.l.s4 1983009808
        %v412 = vunpack.c.0.s8 %v411
        %v413 = vperm.slane %v407, %v412
        %v415 = vunpack.c.l.s4 1983009808
        %v416 = vunpack.c.0.s8 %v415
        %v417 = vperm.slane %v409, %v416
        %v418 = vrot.slane %v403, 4
        %v419 = vsel %vm406, %v418, %v397
        %v420 = vrot.slane %v397, 4
        %v421 = vsel %vm406, %v403, %v420
        %v423 = vunpack.c.l.s4 1983009808
        %v424 = vunpack.c.0.s8 %v423
        %v425 = vperm.slane %v419, %v424
        %v427 = vunpack.c.l.s4 1983009808
        %v428 = vunpack.c.0.s8 %v427
        %v429 = vperm.slane %v421, %v428
        %v430 = vrot.slane %v425, 4
        %v431 = vsel %vm406, %v430, %v413
        %v432 = vrot.slane %v413, 4
        %v433 = vsel %vm406, %v425, %v432
        %v435 = vunpack.c.l.s4 1934713408
        %v436 = vunpack.c.0.s8 %v435
        %v437 = vperm.slane %v431, %v436
        %v439 = vunpack.c.l.s4 1934713408
        %v440 = vunpack.c.0.s8 %v439
        %v441 = vperm.slane %v433, %v440
        %v442 = vrot.slane %v429, 4
        %v443 = vsel %vm406, %v442, %v417
        %v444 = vrot.slane %v417, 4
        %v445 = vsel %vm406, %v429, %v444
        %v447 = vunpack.c.l.s4 1934713408
        %v448 = vunpack.c.0.s8 %v447
        %v449 = vperm.slane %v443, %v448
        %v451 = vunpack.c.l.s4 1934713408
        %v452 = vunpack.c.0.s8 %v451
        %v453 = vperm.slane %v445, %v452
        %v454 = vrot.slane %v437, 4
        %v455 = vsel %vm406, 0.0, %v454
        %v456 = vrot.slane %v441, 4
        %v457 = vsel %vm406, 0.0, %v456
        %v458 = vrot.slane %v449, 4
        %v459 = vsel %vm406, 0.0, %v458
        %v460 = vrot.slane %v453, 4
        %v461 = vsel %vm406, 0.0, %v460
        %v462 = vsel %vm406, %v456, %v437
        %v464 = vunpack.c.l.s4 1983009808
        %v465 = vunpack.c.0.s8 %v464
        %v466 = vperm.slane %v462, %v465
        %v467 = vrot.slane %v457, 4
        %v468 = vsel %vm406, %v467, %v455
        %v470 = vunpack.c.l.s4 1983009808
        %v471 = vunpack.c.0.s8 %v470
        %v472 = vperm.slane %v468, %v471
        %v473 = vsel %vm406, %v460, %v449
        %v475 = vunpack.c.l.s4 1983009808
        %v476 = vunpack.c.0.s8 %v475
        %v477 = vperm.slane %v473, %v476
        %v478 = vrot.slane %v461, 4
        %v479 = vsel %vm406, %v478, %v459
        %v481 = vunpack.c.l.s4 1983009808
        %v482 = vunpack.c.0.s8 %v481
        %v483 = vperm.slane %v479, %v482
        %v484 = vrot.slane %v472, 4
        %v485 = vsel %vm406, %v484, %v466
        %v486 = vrot.slane %v466, 4
        %v487 = vsel %vm406, %v472, %v486
        %v489 = vunpack.c.l.s4 1934713408
        %v490 = vunpack.c.0.s8 %v489
        %v491 = vperm.slane %v485, %v490
        %v493 = vunpack.c.l.s4 1934713408
        %v494 = vunpack.c.0.s8 %v493
        %v495 = vperm.slane %v487, %v494
        %v496 = vrot.slane %v483, 4
        %v497 = vsel %vm406, %v496, %v477
        %v498 = vrot.slane %v477, 4
        %v499 = vsel %vm406, %v483, %v498
        %v501 = vunpack.c.l.s4 1934713408
        %v502 = vunpack.c.0.s8 %v501
        %v503 = vperm.slane %v497, %v502
        %v505 = vunpack.c.l.s4 1934713408
        %v506 = vunpack.c.0.s8 %v505
        %v507 = vperm.slane %v499, %v506
        %v508 = vrot.slane %v503, 4
        %v509 = vsel %vm406, %v508, %v491
        %v510 = vrot.slane %v491, 4
        %v511 = vsel %vm406, %v503, %v510
        %v512 = vrot.slane %v507, 4
        %v513 = vsel %vm406, %v512, %v495
        %v514 = vrot.slane %v495, 4
        %v515 = vsel %vm406, %v507, %v514
        %v516 = vpack.c.bf16 %v509, %v509
        %v517 = vpack.c.bf16 %v511, %v511
        %v518 = vpack.c.bf16 %v513, %v513
        %v519 = vpack.c.bf16 %v515, %v515
        %vm520 = vcmask 60416
        %521 = vst.msk [vmem:[%s303] sm:$0xf] %vm520, %v516
        %522 = vst.msk [vmem:[%s303 + $0x4] sm:$0xf] %vm520, %v517
        %523 = vst.msk [vmem:[%s303 + $0x8] sm:$0xf] %vm520, %v518
        %524 = vst.msk [vmem:[%s303 + $0xc] sm:$0xf] %vm520, %v519
        %526 = vrot.lane.b32.xlu0 %v391, 120
        %v527 = vpop.permute.xlu0 %526
        %528 = vrot.lane.b32.xlu0 %v391, 112
        %v529 = vpop.permute.xlu0 %528
        %530 = vrot.lane.b32.xlu0 %v391, 104
        %v531 = vpop.permute.xlu0 %530
        %532 = vrot.lane.b32.xlu0 %v391, 96
        %v533 = vpop.permute.xlu0 %532
        %534 = vrot.lane.b32.xlu0 %v527, 96
        %v535 = vpop.permute.xlu0 %534
        %536 = vrot.lane.b32.xlu0 %v529, 96
        %v537 = vpop.permute.xlu0 %536
        %538 = vrot.lane.b32.xlu0 %v531, 96
        %v539 = vpop.permute.xlu0 %538
        %v544 = vrot.slane %v537, 4
        %v545 = vsel %vm406, %v544, %v533
        %v546 = vrot.slane %v533, 4
        %v547 = vsel %vm406, %v537, %v546
        %v549 = vunpack.c.l.s4 1983009808
        %v550 = vunpack.c.0.s8 %v549
        %v551 = vperm.slane %v545, %v550
        %v553 = vunpack.c.l.s4 1983009808
        %v554 = vunpack.c.0.s8 %v553
        %v555 = vperm.slane %v547, %v554
        %v556 = vrot.slane %v539, 4
        %v557 = vsel %vm406, %v556, %v535
        %v558 = vrot.slane %v535, 4
        %v559 = vsel %vm406, %v539, %v558
        %v561 = vunpack.c.l.s4 1983009808
        %v562 = vunpack.c.0.s8 %v561
        %v563 = vperm.slane %v557, %v562
        %v565 = vunpack.c.l.s4 1983009808
        %v566 = vunpack.c.0.s8 %v565
        %v567 = vperm.slane %v559, %v566
        %v568 = vrot.slane %v563, 4
        %v569 = vsel %vm406, %v568, %v551
        %v570 = vrot.slane %v551, 4
        %v571 = vsel %vm406, %v563, %v570
        %v573 = vunpack.c.l.s4 1934713408
        %v574 = vunpack.c.0.s8 %v573
        %v575 = vperm.slane %v569, %v574
        %v577 = vunpack.c.l.s4 1934713408
        %v578 = vunpack.c.0.s8 %v577
        %v579 = vperm.slane %v571, %v578
        %v580 = vrot.slane %v567, 4
        %v581 = vsel %vm406, %v580, %v555
        %v582 = vrot.slane %v555, 4
        %v583 = vsel %vm406, %v567, %v582
        %v585 = vunpack.c.l.s4 1934713408
        %v586 = vunpack.c.0.s8 %v585
        %v587 = vperm.slane %v581, %v586
        %v589 = vunpack.c.l.s4 1934713408
        %v590 = vunpack.c.0.s8 %v589
        %v591 = vperm.slane %v583, %v590
        %v592 = vrot.slane %v575, 4
        %v593 = vsel %vm406, 0.0, %v592
        %v594 = vrot.slane %v579, 4
        %v595 = vsel %vm406, 0.0, %v594
        %v596 = vrot.slane %v587, 4
        %v597 = vsel %vm406, 0.0, %v596
        %v598 = vrot.slane %v591, 4
        %v599 = vsel %vm406, 0.0, %v598
        %v600 = vsel %vm406, %v594, %v575
        %v602 = vunpack.c.l.s4 1983009808
        %v603 = vunpack.c.0.s8 %v602
        %v604 = vperm.slane %v600, %v603
        %v605 = vrot.slane %v595, 4
        %v606 = vsel %vm406, %v605, %v593
        %v608 = vunpack.c.l.s4 1983009808
        %v609 = vunpack.c.0.s8 %v608
        %v610 = vperm.slane %v606, %v609
        %v611 = vsel %vm406, %v598, %v587
        %v613 = vunpack.c.l.s4 1983009808
        %v614 = vunpack.c.0.s8 %v613
        %v615 = vperm.slane %v611, %v614
        %v616 = vrot.slane %v599, 4
        %v617 = vsel %vm406, %v616, %v597
        %v619 = vunpack.c.l.s4 1983009808
        %v620 = vunpack.c.0.s8 %v619
        %v621 = vperm.slane %v617, %v620
        %v622 = vrot.slane %v610, 4
        %v623 = vsel %vm406, %v622, %v604
        %v624 = vrot.slane %v604, 4
        %v625 = vsel %vm406, %v610, %v624
        %v627 = vunpack.c.l.s4 1934713408
        %v628 = vunpack.c.0.s8 %v627
        %v629 = vperm.slane %v623, %v628
        %v631 = vunpack.c.l.s4 1934713408
        %v632 = vunpack.c.0.s8 %v631
        %v633 = vperm.slane %v625, %v632
        %v634 = vrot.slane %v621, 4
        %v635 = vsel %vm406, %v634, %v615
        %v636 = vrot.slane %v615, 4
        %v637 = vsel %vm406, %v621, %v636
        %v639 = vunpack.c.l.s4 1934713408
        %v640 = vunpack.c.0.s8 %v639
        %v641 = vperm.slane %v635, %v640
        %v643 = vunpack.c.l.s4 1934713408
        %v644 = vunpack.c.0.s8 %v643
        %v645 = vperm.slane %v637, %v644
        %v646 = vrot.slane %v641, 4
        %v647 = vsel %vm406, %v646, %v629
        %v648 = vrot.slane %v629, 4
        %v649 = vsel %vm406, %v641, %v648
        %v650 = vrot.slane %v645, 4
        %v651 = vsel %vm406, %v650, %v633
        %v652 = vrot.slane %v633, 4
        %v653 = vsel %vm406, %v645, %v652
        %v654 = vpack.c.bf16 %v647, %v647
        %v655 = vpack.c.bf16 %v649, %v649
        %v656 = vpack.c.bf16 %v651, %v651
        %v657 = vpack.c.bf16 %v653, %v653
        %658 = vst.msk [vmem:[%s310] sm:$0xf] %vm520, %v654
        %659 = vst.msk [vmem:[%s310 + $0x4] sm:$0xf] %vm520, %v655
        %660 = vst.msk [vmem:[%s310 + $0x8] sm:$0xf] %vm520, %v656
        %661 = vst.msk [vmem:[%s310 + $0xc] sm:$0xf] %vm520, %v657
        %662 = vrot.lane.b32.xlu0 %v391, 64
        %v663 = vpop.permute.xlu0 %662
        %664 = vrot.lane.b32.xlu0 %v527, 64
        %v665 = vpop.permute.xlu0 %664
        %666 = vrot.lane.b32.xlu0 %v529, 64
        %v667 = vpop.permute.xlu0 %666
        %668 = vrot.lane.b32.xlu0 %v531, 64
        %v669 = vpop.permute.xlu0 %668
        %v674 = vrot.slane %v667, 4
        %v675 = vsel %vm406, %v674, %v663
        %v676 = vrot.slane %v663, 4
        %v677 = vsel %vm406, %v667, %v676
        %v679 = vunpack.c.l.s4 1983009808
        %v680 = vunpack.c.0.s8 %v679
        %v681 = vperm.slane %v675, %v680
        %v683 = vunpack.c.l.s4 1983009808
        %v684 = vunpack.c.0.s8 %v683
        %v685 = vperm.slane %v677, %v684
        %v686 = vrot.slane %v669, 4
        %v687 = vsel %vm406, %v686, %v665
        %v688 = vrot.slane %v665, 4
        %v689 = vsel %vm406, %v669, %v688
        %v691 = vunpack.c.l.s4 1983009808
        %v692 = vunpack.c.0.s8 %v691
        %v693 = vperm.slane %v687, %v692
        %v695 = vunpack.c.l.s4 1983009808
        %v696 = vunpack.c.0.s8 %v695
        %v697 = vperm.slane %v689, %v696
        %v698 = vrot.slane %v693, 4
        %v699 = vsel %vm406, %v698, %v681
        %v700 = vrot.slane %v681, 4
        %v701 = vsel %vm406, %v693, %v700
        %v703 = vunpack.c.l.s4 1934713408
        %v704 = vunpack.c.0.s8 %v703
        %v705 = vperm.slane %v699, %v704
        %v707 = vunpack.c.l.s4 1934713408
        %v708 = vunpack.c.0.s8 %v707
        %v709 = vperm.slane %v701, %v708
        %v710 = vrot.slane %v697, 4
        %v711 = vsel %vm406, %v710, %v685
        %v712 = vrot.slane %v685, 4
        %v713 = vsel %vm406, %v697, %v712
        %v715 = vunpack.c.l.s4 1934713408
        %v716 = vunpack.c.0.s8 %v715
        %v717 = vperm.slane %v711, %v716
        %v719 = vunpack.c.l.s4 1934713408
        %v720 = vunpack.c.0.s8 %v719
        %v721 = vperm.slane %v713, %v720
        %v722 = vrot.slane %v705, 4
        %v723 = vsel %vm406, 0.0, %v722
        %v724 = vrot.slane %v709, 4
        %v725 = vsel %vm406, 0.0, %v724
        %v726 = vrot.slane %v717, 4
        %v727 = vsel %vm406, 0.0, %v726
        %v728 = vrot.slane %v721, 4
        %v729 = vsel %vm406, 0.0, %v728
        %v730 = vsel %vm406, %v724, %v705
        %v732 = vunpack.c.l.s4 1983009808
        %v733 = vunpack.c.0.s8 %v732
        %v734 = vperm.slane %v730, %v733
        %v735 = vrot.slane %v725, 4
        %v736 = vsel %vm406, %v735, %v723
        %v738 = vunpack.c.l.s4 1983009808
        %v739 = vunpack.c.0.s8 %v738
        %v740 = vperm.slane %v736, %v739
        %v741 = vsel %vm406, %v728, %v717
        %v743 = vunpack.c.l.s4 1983009808
        %v744 = vunpack.c.0.s8 %v743
        %v745 = vperm.slane %v741, %v744
        %v746 = vrot.slane %v729, 4
        %v747 = vsel %vm406, %v746, %v727
        %v749 = vunpack.c.l.s4 1983009808
        %v750 = vunpack.c.0.s8 %v749
        %v751 = vperm.slane %v747, %v750
        %v752 = vrot.slane %v740, 4
        %v753 = vsel %vm406, %v752, %v734
        %v754 = vrot.slane %v734, 4
        %v755 = vsel %vm406, %v740, %v754
        %v757 = vunpack.c.l.s4 1934713408
        %v758 = vunpack.c.0.s8 %v757
        %v759 = vperm.slane %v753, %v758
        %v761 = vunpack.c.l.s4 1934713408
        %v762 = vunpack.c.0.s8 %v761
        %v763 = vperm.slane %v755, %v762
        %v764 = vrot.slane %v751, 4
        %v765 = vsel %vm406, %v764, %v745
        %v766 = vrot.slane %v745, 4
        %v767 = vsel %vm406, %v751, %v766
        %v769 = vunpack.c.l.s4 1934713408
        %v770 = vunpack.c.0.s8 %v769
        %v771 = vperm.slane %v765, %v770
        %v773 = vunpack.c.l.s4 1934713408
        %v774 = vunpack.c.0.s8 %v773
        %v775 = vperm.slane %v767, %v774
        %v776 = vrot.slane %v771, 4
        %v777 = vsel %vm406, %v776, %v759
        %v778 = vrot.slane %v759, 4
        %v779 = vsel %vm406, %v771, %v778
        %v780 = vrot.slane %v775, 4
        %v781 = vsel %vm406, %v780, %v763
        %v782 = vrot.slane %v763, 4
        %v783 = vsel %vm406, %v775, %v782
        %v784 = vpack.c.bf16 %v777, %v777
        %v785 = vpack.c.bf16 %v779, %v779
        %v786 = vpack.c.bf16 %v781, %v781
        %v787 = vpack.c.bf16 %v783, %v783
        %788 = vst.msk [vmem:[%s317] sm:$0xf] %vm520, %v784
        %789 = vst.msk [vmem:[%s317 + $0x4] sm:$0xf] %vm520, %v785
        %790 = vst.msk [vmem:[%s317 + $0x8] sm:$0xf] %vm520, %v786
        %791 = vst.msk [vmem:[%s317 + $0xc] sm:$0xf] %vm520, %v787
        %s792 = sand.u32 %s125, 1
        %s793 = scalar_lea.sflag [#allocation4], %s792
        %s794 = sand.u32 %s125, 1
        %s795 = smul.addr %s794, 16
        %s796 = scalar_lea.vmem [#allocation8], %s795
        %s797 = sand.u32 %s28, 1
        %s798 = scalar_lea.sflag [#allocation10], %s797
        %s799 = sand.u32 %s151, 1
        %s800 = smul.addr %s799, 16
        %s801 = scalar_lea.vmem [#allocation9], %s800
        %s802 = sand.u32 %s28, 1
        %s803 = scalar_lea.sflag [#allocation10], %s802
        %s804 = sand.u32 %s177, 1
        %s805 = smul.addr %s804, 16
        %s806 = scalar_lea.vmem [#allocation11], %s805
        // Predicated region
        $region49: #{tpu_custom_call.1} parent=35 // pred_check
          %p807 = pneg %p135
        $region50: #{tpu_custom_call.1} parent=35 // pred_check_branch
          %809 = sbr.rel (%p807) target = $region52
        $region51: #{tpu_custom_call.1} parent=35 // pred_region
          %811 = vsyncadd %s793, 0
          %s812 = smul.addr %s28, 4
          %s813 = smul.addr %s812, 4
          %s814 = scalar_lea.hbm %s4, %s813
          %s815 = sshll.u32 %s796, 4
          %s816 = int_to_ptr.vmem [resolvable:$true] %s815
          %s817 = sshll.u32 %s814, 4
          %s818 = int_to_ptr.hbm [resolvable:$true] %s817
          %823 = dma.vmem_to_hbm [thread:$0]  %s816, 256, %s818, %s793, 64, 64, 4
        $region52: #{tpu_custom_call.1} parent=35 // pred_fallthru
          _
        // Predicated region
        $region53: #{tpu_custom_call.1} parent=35 // pred_check
          %p824 = pneg %p161
        $region54: #{tpu_custom_call.1} parent=35 // pred_check_branch
          %826 = sbr.rel (%p824) target = $region56
        $region55: #{tpu_custom_call.1} parent=35 // pred_region
          %828 = vsyncadd %s798, 0
          %s829 = smul.addr %s28, 4
          %s830 = smul.addr %s829, 4
          %s831 = scalar_lea.hbm %s5, %s830
          %s832 = sshll.u32 %s801, 4
          %s833 = int_to_ptr.vmem [resolvable:$true] %s832
          %s834 = sshll.u32 %s831, 4
          %s835 = int_to_ptr.hbm [resolvable:$true] %s834
          %840 = dma.vmem_to_hbm [thread:$0]  %s833, 256, %s835, %s798, 64, 64, 4
        $region56: #{tpu_custom_call.1} parent=35 // pred_fallthru
          _
        // Predicated region
        $region57: #{tpu_custom_call.1} parent=35 // pred_check
          %p841 = pneg %p187
        $region58: #{tpu_custom_call.1} parent=35 // pred_check_branch
          %843 = sbr.rel (%p841) target = $region60
        $region59: #{tpu_custom_call.1} parent=35 // pred_region
          %845 = vsyncadd %s803, 0
          %s846 = smul.addr %s28, 4
          %s847 = smul.addr %s846, 4
          %s848 = scalar_lea.hbm %s6, %s847
          %s849 = sshll.u32 %s806, 4
          %s850 = int_to_ptr.vmem [resolvable:$true] %s849
          %s851 = sshll.u32 %s848, 4
          %s852 = int_to_ptr.hbm [resolvable:$true] %s851
          %857 = dma.vmem_to_hbm [thread:$0]  %s850, 256, %s852, %s803, 64, 64, 4
        $region60: #{tpu_custom_call.1} parent=35 // pred_fallthru
          _
      $region36: #{tpu_custom_call.1} parent=5 // pred_fallthru
        _
      %p858 = scmp.le.s32.totalorder 2, %s23
      // Predicated region
      $region61: #{tpu_custom_call.1} parent=5 // pred_check
        %p859 = pneg %p858
      $region62: #{tpu_custom_call.1} parent=5 // pred_check_branch
        %861 = sbr.rel (%p859) target = $region64
      $region63: #{tpu_custom_call.1} parent=5 // pred_region
        %s862 = ssub.s32 %s23, 2
        // Predicated region
        $region65: #{tpu_custom_call.1} parent=63 // pred_check
          %p863 = pneg %p141
        $region66: #{tpu_custom_call.1} parent=63 // pred_check_branch
          %865 = sbr.rel (%p863) target = $region68
        $region67: #{tpu_custom_call.1} parent=63 // pred_region
          %s866 = sand.u32 %s126, 1
          %s867 = scalar_lea.sflag [#allocation4], %s866
          %s868 = sand.u32 %s126, 1
          %s869 = smul.addr %s868, 16
          %s870 = scalar_lea.vmem [#allocation8], %s869
          %872 = dma.done %s867, 256
        $region68: #{tpu_custom_call.1} parent=63 // pred_fallthru
          _
        // Predicated region
        $region69: #{tpu_custom_call.1} parent=63 // pred_check
          %p873 = pneg %p167
        $region70: #{tpu_custom_call.1} parent=63 // pred_check_branch
          %875 = sbr.rel (%p873) target = $region72
        $region71: #{tpu_custom_call.1} parent=63 // pred_region
          %s876 = sand.u32 %s29, 1
          %s877 = scalar_lea.sflag [#allocation10], %s876
          %s878 = sand.u32 %s152, 1
          %s879 = smul.addr %s878, 16
          %s880 = scalar_lea.vmem [#allocation9], %s879
          %882 = dma.done %s877, 256
        $region72: #{tpu_custom_call.1} parent=63 // pred_fallthru
          _
        // Predicated region
        $region73: #{tpu_custom_call.1} parent=63 // pred_check
          %p883 = pneg %p193
        $region74: #{tpu_custom_call.1} parent=63 // pred_check_branch
          %885 = sbr.rel (%p883) target = $region76
        $region75: #{tpu_custom_call.1} parent=63 // pred_region
          %s886 = sand.u32 %s29, 1
          %s887 = scalar_lea.sflag [#allocation10], %s886
          %s888 = sand.u32 %s178, 1
          %s889 = smul.addr %s888, 16
          %s890 = scalar_lea.vmem [#allocation11], %s889
          %892 = dma.done %s887, 256
        $region76: #{tpu_custom_call.1} parent=63 // pred_fallthru
          _
      $region64: #{tpu_custom_call.1} parent=5 // pred_fallthru
        _
    $region6: #{tpu_custom_call.1} parent=1 // loop_footer
      %s27 = sadd.s32 1, %s23
    $region7: #{tpu_custom_call.1} parent=1 // loop_footer_branch
      %22 = sbr.rel target = $region3
    $region8: #{tpu_custom_call.1} parent=1 // loop_exit
      _
    %893 = vsyncpa [#allocation3], 1
    %s894 = scalar_lea.sflag [#allocation3], 1
    %895 = vsyncpa %s894, 1
    %896 = vsyncpa [#allocation6], 1
    %897 = vsyncpa [#allocation4], 1
    %s898 = scalar_lea.sflag [#allocation4], 1
    %899 = vsyncpa %s898, 1
    %900 = vsyncpa [#allocation10], 1
    %s901 = scalar_lea.sflag [#allocation10], 1
    %902 = vsyncpa %s901, 1

</llo_original>
